<compile_context>
chip_gen: v7x
topology: tpu7x:2x2x1
jax: 0.10.0
libtpu: 0.0.40
codegen_flags: <defaults>
</compile_context>

<pallas_src>
import functools

import jax
import jax.numpy as jnp
import numpy as np
from jax import lax
from jax.experimental import pallas as pl
from jax.experimental.pallas import tpu as pltpu


def _cdiv(a, b):
    return -(-a // b)


def _round_up(v, m):
    return _cdiv(v, m) * m


_TARGET_TILE_BYTES = 4 * 1024 * 1024     # per x tile (VMEM footprint, lane-padded)
_VMEM_LIMIT_BYTES = 32 * 1024 * 1024     # safe on v5e/v6e (128 MiB) and v7x (64 MiB)


# ---------------------------------------------------------------------------
# Pass 1: streaming per-column partial statistics (centered on running mean).
# Grid = (num_splits, tiles_per_core); leading axis is "parallel" so on v7x
# the two TensorCores each produce their own (1, 1, L) partial-sum blocks.
# ---------------------------------------------------------------------------
def _stats_kernel(mean_ref, x_ref, sum_ref, sumsq_ref, noth_ref, *,
                  tiles_per_core, row_tile, n_valid_rows, needs_mask):
    c = pl.program_id(0)
    t = pl.program_id(1)

    @pl.when(t == 0)
    def _init():
        sum_ref[...] = jnp.zeros_like(sum_ref)
        sumsq_ref[...] = jnp.zeros_like(sumsq_ref)
        noth_ref[...] = jnp.zeros_like(noth_ref)

    x = x_ref[...].astype(jnp.float32)               # (row_tile, L)
    cen = x - mean_ref[...]                          # centered on running mean
    # "not one-hot" indicator with exact compares (as in the torch reference);
    # only `any > 0` is needed, so it is max-accumulated (pure VALU, no MXU).
    ind = ((x != 0.0) & (jnp.abs(x) != 1.0)).astype(jnp.float32)

    if needs_mask:
        # Mask rows that fall beyond the real row count (ragged last tile or
        # duplicated clamp tiles) instead of zero-padding the array in HBM.
        row0 = (c * tiles_per_core + t) * row_tile
        rid = row0 + lax.broadcasted_iota(jnp.int32, (row_tile, 1), 0)
        valid = rid < n_valid_rows
        cen = jnp.where(valid, cen, 0.0)
        ind = jnp.where(valid, ind, 0.0)

    sum_ref[...] += jnp.sum(cen, axis=0, keepdims=True)[None]
    sumsq_ref[...] += jnp.sum(cen * cen, axis=0, keepdims=True)[None]
    noth_ref[...] = jnp.maximum(noth_ref[...],
                                jnp.max(ind, axis=0, keepdims=True)[None])


# ---------------------------------------------------------------------------
# Pass 2: normalize row tiles with the updated stats (pure elementwise).
# ---------------------------------------------------------------------------
def _norm_kernel(x_ref, mean_ref, istd_ref, y_ref):
    xf = x_ref[...].astype(jnp.float32)
    y = jnp.clip((xf - mean_ref[...]) * istd_ref[...], -10.0, 10.0)
    y_ref[...] = y.astype(y_ref.dtype)


@jax.jit
def dynamic_norm_train(x, mean, var, one_hot_filter, n_sample):
    """Py_Dynamic_Norm.forward(x) in training mode (exclude_one_hot=True,
    only_for_last_dim=True).  Returns (y, new_mean, new_var, new_filter,
    new_n_sample); the nn.Parameter state updates are returned functionally."""
    orig_shape = x.shape
    D = orig_shape[-1]
    N = x.size // D                                   # total rows (batch size)

    # ---- working layout: fold rows into lanes when the reshape is free -----
    if D < 128 and 128 % D == 0 and N % (128 // D) == 0:
        fold = 128 // D                               # lane-dense folded layout
    else:
        fold = 1                                      # full-extent last dim
    L = D * fold
    Nr = N // fold
    x_work = x.reshape(Nr, L)                         # contiguous -> no copy

    mean_f = mean.astype(jnp.float32)
    var_f = var.astype(jnp.float32)
    filt_b = one_hot_filter.astype(bool)
    mean_work = jnp.tile(mean_f, fold).reshape(1, L)

    # ---- tiling -------------------------------------------------------------
    lane_pad = _round_up(L, 128)                      # VMEM lane padding
    rows = max(8, (_TARGET_TILE_BYTES // (lane_pad * 4)) // 8 * 8)
    row_tile = min(rows, _round_up(Nr, 8))
    tiles_total = _cdiv(Nr, row_tile)
    num_splits = 2 if tiles_total > 1 else 1          # v7x megacore split
    tiles_per_core = _cdiv(tiles_total, num_splits)
    needs_mask = (num_splits * tiles_per_core * row_tile) != Nr

    # ---- pass 1: partial column statistics ----------------------------------
    x_spec_p1 = pl.BlockSpec(
        (row_tile, L),
        lambda c, t: (jnp.minimum(c * tiles_per_core + t, tiles_total - 1), 0))
    mean_spec_p1 = pl.BlockSpec((1, L), lambda c, t: (0, 0))
    part_spec = pl.BlockSpec((1, 1, L), lambda c, t: (c, 0, 0))
    part_shape = jax.ShapeDtypeStruct((num_splits, 1, L), jnp.float32)

    sums_p, sumsqs_p, noth_p = pl.pallas_call(
        functools.partial(_stats_kernel, tiles_per_core=tiles_per_core,
                          row_tile=row_tile, n_valid_rows=Nr,
                          needs_mask=needs_mask),
        out_shape=(part_shape, part_shape, part_shape),
        grid=(num_splits, tiles_per_core),
        in_specs=[mean_spec_p1, x_spec_p1],
        out_specs=(part_spec, part_spec, part_spec),
        compiler_params=pltpu.CompilerParams(
            dimension_semantics=("parallel", "arbitrary"),
            vmem_limit_bytes=_VMEM_LIMIT_BYTES),
    )(mean_work, x_work)

    # ---- finalize (tiny, plain JAX): Chan combine + clip + one-hot filter ---
    s = jnp.sum(sums_p, axis=(0, 1))                  # sum(x - mean)     (L,)
    q = jnp.sum(sumsqs_p, axis=(0, 1))                # sum((x - mean)^2) (L,)
    noth = jnp.max(noth_p, axis=(0, 1))               # any not-one-hot   (L,)
    if fold > 1:                                      # un-fold lanes -> features
        s = s.reshape(fold, D).sum(0)
        q = q.reshape(fold, D).sum(0)
        noth = noth.reshape(fold, D).max(0)

    bs = jnp.float32(N)
    n_f = jnp.sum(n_sample).astype(jnp.float32)
    d = s / bs                                        # batch_mean - running_mean
    batch_var = jnp.maximum(q / bs - d * d, 0.0)
    tot = n_f + bs
    new_mean = mean_f + d * (bs / tot)
    m2 = var_f * n_f + batch_var * bs + d * d * (n_f * bs / tot)
    new_var = m2 / tot
    new_filt = filt_b & (noth <= 0.0)
    upd_mean = jnp.where(new_filt, mean_f, new_mean)
    upd_var = jnp.where(new_filt, var_f, jnp.clip(new_var, 0.01, 1000.0))
    istd = 1.0 / jnp.sqrt(upd_var + 1e-8)

    mean_norm = jnp.tile(upd_mean, fold).reshape(1, L)
    istd_norm = jnp.tile(istd, fold).reshape(1, L)

    # ---- pass 2: normalize ---------------------------------------------------
    tile_spec = pl.BlockSpec((row_tile, L), lambda i: (i, 0))
    row_spec = pl.BlockSpec((1, L), lambda i: (0, 0))
    y_work = pl.pallas_call(
        _norm_kernel,
        out_shape=jax.ShapeDtypeStruct((Nr, L), x.dtype),
        grid=(tiles_total,),
        in_specs=[tile_spec, row_spec, row_spec],
        out_specs=tile_spec,
        compiler_params=pltpu.CompilerParams(
            dimension_semantics=("parallel",),
            vmem_limit_bytes=_VMEM_LIMIT_BYTES),
    )(x_work, mean_norm, istd_norm)

    y = y_work.reshape(orig_shape)
    new_n = n_sample + jnp.asarray(N, n_sample.dtype)  # exact integer count
    return y, upd_mean, upd_var, new_filt, new_n


def _reference(x, mean, var, filt, n):
    """Pure-numpy replica of the PyTorch forward (training mode)."""
    x = np.asarray(x, np.float32)
    D = x.shape[-1]
    x2d = x.reshape(-1, D)
    bs = x2d.shape[0]
    bmean = x2d.mean(0)
    bvar = ((x2d - bmean) ** 2).mean(0)
    delta = bmean - mean
    tot = n + bs
    new_mean = mean + delta * bs / tot
    m2 = var * n + bvar * bs + delta ** 2 * n * bs / tot
    new_var = m2 / tot
    not_oh = ((x2d != 0) & (x2d != 1) & (x2d != -1)).any(0)
    new_filt = filt & (~not_oh)
    new_var_clip = np.clip(new_var, 0.01, 1000.0)
    upd_mean = np.where(new_filt, mean, new_mean)
    upd_var = np.where(new_filt, var, new_var_clip)
    y = np.clip((x - upd_mean) / np.sqrt(upd_var + 1e-8), -10, 10)
    return y, upd_mean, upd_var, new_filt, tot


if __name__ == "__main__":
    key = jax.random.PRNGKey(0)
    B, T, D = 2, 8, 32                    # input_size = 32

    x = jax.random.normal(key, (B, T, D), dtype=jnp.float32)
    # make the first 3 feature columns look one-hot (values in {0, 1}) so that
    # the exclude_one_hot path is exercised
    onehot_cols = (jax.random.uniform(jax.random.PRNGKey(1), (B, T, 3)) > 0.5
                   ).astype(jnp.float32)
    x = x.at[..., :3].set(onehot_cols)

    # deterministic initial state, matching nn.Parameter init in __init__
    mean0 = jnp.zeros((D,), jnp.float32)
    var0 = jnp.ones((D,), jnp.float32)
    filt0 = jnp.ones((D,), bool)
    n0 = jnp.zeros((1,), jnp.int32)

    y, nm, nv, nf, nn = dynamic_norm_train(x, mean0, var0, filt0, n0)
    jax.block_until_ready((y, nm, nv, nf, nn))

    # correctness check vs. pure-numpy reference of the torch semantics
    ry, rm, rv, rf, rn = _reference(np.asarray(x), np.asarray(mean0),
                                    np.asarray(var0), np.asarray(filt0),
                                    int(n0[0]))
    np.testing.assert_allclose(np.asarray(y), ry, rtol=1e-5, atol=1e-5)
    np.testing.assert_allclose(np.asarray(nm), rm, rtol=1e-5, atol=1e-5)
    np.testing.assert_allclose(np.asarray(nv), rv, rtol=1e-5, atol=1e-5)
    np.testing.assert_array_equal(np.asarray(nf), rf)
    assert int(nn[0]) == rn

    print("KERNEL_OK")
</pallas_src>

<mosaic_0001>
module attributes {stable_mosaic.version = 11 : i64} {
  func.func @_stats_kernel(%arg0: i32, %arg1: i32, %arg2: memref<1x128xf32, #tpu.memory_space<vmem>>, %arg3: memref<8x128xf32, #tpu.memory_space<vmem>>, %arg4: memref<1x1x128xf32, #tpu.memory_space<vmem>>, %arg5: memref<1x1x128xf32, #tpu.memory_space<vmem>>, %arg6: memref<1x1x128xf32, #tpu.memory_space<vmem>>) attributes {dimension_semantics = [#tpu.dimension_semantics<parallel>, #tpu.dimension_semantics<arbitrary>], iteration_bounds = array<i64: 1, 1>, scalar_prefetch = 0 : i64, scratch_operands = 0 : i64, tpu.core_type = #tpu.core_type<tc>, window_params = [{pipeline_mode = #tpu.pipeline_mode<synchronous>, transform_indices = @transform_0, window_bounds = array<i64: 1, 128>}, {transform_indices = @transform_1, window_bounds = array<i64: 8, 128>}, {transform_indices = @transform_2, window_bounds = array<i64: 1, 1, 128>}, {transform_indices = @transform_3, window_bounds = array<i64: 1, 1, 128>}, {transform_indices = @transform_4, window_bounds = array<i64: 1, 1, 128>}]} {
    %c0_i32 = arith.constant 0 : i32
    %0 = arith.cmpi eq, %arg1, %c0_i32 : i32
    %1 = arith.extui %0 : i1 to i32
    %c0_i32_0 = arith.constant 0 : i32
    %2 = arith.cmpi ne, %1, %c0_i32_0 : i32
    scf.if %2 {
      %cst_28 = arith.constant 0.000000e+00 : f32
      %50 = vector.broadcast %cst_28 : f32 to vector<1x1x128xf32>
      %c0_29 = arith.constant 0 : index
      %c0_30 = arith.constant 0 : index
      %c0_31 = arith.constant 0 : index
      %51 = vector.load %arg4[%c0_29, %c0_30, %c0_31] : memref<1x1x128xf32, #tpu.memory_space<vmem>>, vector<1x1x128xf32>
      tpu.vector_store %arg4[%c0_29, %c0_30, %c0_31], %50 {strides = array<i32>} : memref<1x1x128xf32, #tpu.memory_space<vmem>>, vector<1x1x128xf32>,
      %cst_32 = arith.constant 0.000000e+00 : f32
      %52 = vector.broadcast %cst_32 : f32 to vector<1x1x128xf32>
      %c0_33 = arith.constant 0 : index
      %c0_34 = arith.constant 0 : index
      %c0_35 = arith.constant 0 : index
      %53 = vector.load %arg5[%c0_33, %c0_34, %c0_35] : memref<1x1x128xf32, #tpu.memory_space<vmem>>, vector<1x1x128xf32>
      tpu.vector_store %arg5[%c0_33, %c0_34, %c0_35], %52 {strides = array<i32>} : memref<1x1x128xf32, #tpu.memory_space<vmem>>, vector<1x1x128xf32>,
      %cst_36 = arith.constant 0.000000e+00 : f32
      %54 = vector.broadcast %cst_36 : f32 to vector<1x1x128xf32>
      %c0_37 = arith.constant 0 : index
      %c0_38 = arith.constant 0 : index
      %c0_39 = arith.constant 0 : index
      %55 = vector.load %arg6[%c0_37, %c0_38, %c0_39] : memref<1x1x128xf32, #tpu.memory_space<vmem>>, vector<1x1x128xf32>
      tpu.vector_store %arg6[%c0_37, %c0_38, %c0_39], %54 {strides = array<i32>} : memref<1x1x128xf32, #tpu.memory_space<vmem>>, vector<1x1x128xf32>,
    } else {
    }
    %c0 = arith.constant 0 : index
    %c0_1 = arith.constant 0 : index
    %3 = vector.load %arg3[%c0, %c0_1] : memref<8x128xf32, #tpu.memory_space<vmem>>, vector<8x128xf32>
    %c0_2 = arith.constant 0 : index
    %c0_3 = arith.constant 0 : index
    %4 = vector.load %arg2[%c0_2, %c0_3] : memref<1x128xf32, #tpu.memory_space<vmem>>, vector<1x128xf32>
    %5 = vector.broadcast %4 : vector<1x128xf32> to vector<8x128xf32>
    %6 = arith.subf %3, %5 : vector<8x128xf32>
    %cst = arith.constant 0.000000e+00 : f32
    %7 = vector.broadcast %cst : f32 to vector<8x128xf32>
    %8 = arith.cmpf one, %3, %7 : vector<8x128xf32>
    %9 = math.absf %3 : vector<8x128xf32>
    %cst_4 = arith.constant 1.000000e+00 : f32
    %10 = vector.broadcast %cst_4 : f32 to vector<8x128xf32>
    %11 = arith.cmpf one, %9, %10 : vector<8x128xf32>
    %12 = arith.andi %8, %11 : vector<8x128xi1>
    %13 = arith.extui %12 : vector<8x128xi1> to vector<8x128xi32>
    %14 = arith.sitofp %13 : vector<8x128xi32> to vector<8x128xf32>
    %c1_i32 = arith.constant 1 : i32
    %15 = arith.muli %arg0, %c1_i32 : i32
    %16 = arith.addi %15, %arg1 : i32
    %c8_i32 = arith.constant 8 : i32
    %17 = arith.muli %16, %c8_i32 : i32
    %18 = tpu.iota {dimensions = array<i32: 0>} : vector<8x1xi32>
    %19 = vector.broadcast %17 : i32 to vector<8x1xi32>
    %20 = arith.addi %19, %18 : vector<8x1xi32>
    %c4_i32 = arith.constant 4 : i32
    %21 = vector.broadcast %c4_i32 : i32 to vector<8x1xi32>
    %22 = arith.cmpi slt, %20, %21 : vector<8x1xi32>
    %cst_5 = arith.constant 0.000000e+00 : f32
    %23 = vector.shape_cast %22 : vector<8x1xi1> to vector<8x1xi1>
    %24 = vector.broadcast %23 : vector<8x1xi1> to vector<8x128xi1>
    %25 = vector.broadcast %cst_5 : f32 to vector<8x128xf32>
    %26 = arith.select %24, %6, %25 : vector<8x128xi1>, vector<8x128xf32>
    %cst_6 = arith.constant 0.000000e+00 : f32
    %27 = vector.shape_cast %22 : vector<8x1xi1> to vector<8x1xi1>
    %28 = vector.broadcast %27 : vector<8x1xi1> to vector<8x128xi1>
    %29 = vector.broadcast %cst_6 : f32 to vector<8x128xf32>
    %30 = arith.select %28, %14, %29 : vector<8x128xi1>, vector<8x128xf32>
    %c0_7 = arith.constant 0 : index
    %c0_8 = arith.constant 0 : index
    %c0_9 = arith.constant 0 : index
    %31 = vector.load %arg4[%c0_7, %c0_8, %c0_9] : memref<1x1x128xf32, #tpu.memory_space<vmem>>, vector<1x1x128xf32>
    %cst_10 = arith.constant dense<0.000000e+00> : vector<128xf32>
    %32 = vector.multi_reduction <add>, %26, %cst_10 [0] : vector<8x128xf32> to vector<128xf32>
    %33 = vector.shape_cast %32 : vector<128xf32> to vector<1x128xf32>
    %34 = vector.shape_cast %33 : vector<1x128xf32> to vector<1x1x128xf32>
    %35 = arith.addf %31, %34 : vector<1x1x128xf32>
    %c0_11 = arith.constant 0 : index
    %c0_12 = arith.constant 0 : index
    %c0_13 = arith.constant 0 : index
    %36 = vector.load %arg4[%c0_11, %c0_12, %c0_13] : memref<1x1x128xf32, #tpu.memory_space<vmem>>, vector<1x1x128xf32>
    tpu.vector_store %arg4[%c0_11, %c0_12, %c0_13], %35 {strides = array<i32>} : memref<1x1x128xf32, #tpu.memory_space<vmem>>, vector<1x1x128xf32>,
    %c0_14 = arith.constant 0 : index
    %c0_15 = arith.constant 0 : index
    %c0_16 = arith.constant 0 : index
    %37 = vector.load %arg5[%c0_14, %c0_15, %c0_16] : memref<1x1x128xf32, #tpu.memory_space<vmem>>, vector<1x1x128xf32>
    %38 = arith.mulf %26, %26 : vector<8x128xf32>
    %cst_17 = arith.constant dense<0.000000e+00> : vector<128xf32>
    %39 = vector.multi_reduction <add>, %38, %cst_17 [0] : vector<8x128xf32> to vector<128xf32>
    %40 = vector.shape_cast %39 : vector<128xf32> to vector<1x128xf32>
    %41 = vector.shape_cast %40 : vector<1x128xf32> to vector<1x1x128xf32>
    %42 = arith.addf %37, %41 : vector<1x1x128xf32>
    %c0_18 = arith.constant 0 : index
    %c0_19 = arith.constant 0 : index
    %c0_20 = arith.constant 0 : index
    %43 = vector.load %arg5[%c0_18, %c0_19, %c0_20] : memref<1x1x128xf32, #tpu.memory_space<vmem>>, vector<1x1x128xf32>
    tpu.vector_store %arg5[%c0_18, %c0_19, %c0_20], %42 {strides = array<i32>} : memref<1x1x128xf32, #tpu.memory_space<vmem>>, vector<1x1x128xf32>,
    %c0_21 = arith.constant 0 : index
    %c0_22 = arith.constant 0 : index
    %c0_23 = arith.constant 0 : index
    %44 = vector.load %arg6[%c0_21, %c0_22, %c0_23] : memref<1x1x128xf32, #tpu.memory_space<vmem>>, vector<1x1x128xf32>
    %cst_24 = arith.constant dense<0xFF800000> : vector<128xf32>
    %45 = vector.multi_reduction <maximumf>, %30, %cst_24 [0] : vector<8x128xf32> to vector<128xf32>
    %46 = vector.shape_cast %45 : vector<128xf32> to vector<1x128xf32>
    %47 = vector.shape_cast %46 : vector<1x128xf32> to vector<1x1x128xf32>
    %48 = arith.maximumf %44, %47 : vector<1x1x128xf32>
    %c0_25 = arith.constant 0 : index
    %c0_26 = arith.constant 0 : index
    %c0_27 = arith.constant 0 : index
    %49 = vector.load %arg6[%c0_25, %c0_26, %c0_27] : memref<1x1x128xf32, #tpu.memory_space<vmem>>, vector<1x1x128xf32>
    tpu.vector_store %arg6[%c0_25, %c0_26, %c0_27], %48 {strides = array<i32>} : memref<1x1x128xf32, #tpu.memory_space<vmem>>, vector<1x1x128xf32>,
    return
  }
  func.func @transform_0(%arg0: i32, %arg1: i32) -> (i32, i32) {
    %c0_i32 = arith.constant 0 : i32
    %c0_i32_0 = arith.constant 0 : i32
    %c0_i32_1 = arith.constant 0 : i32
    return %c0_i32, %c0_i32_0 : i32, i32
  }
  func.func @transform_1(%arg0: i32, %arg1: i32) -> (i32, i32) {
    %c1_i32 = arith.constant 1 : i32
    %0 = arith.muli %arg0, %c1_i32 : i32
    %1 = arith.addi %0, %arg1 : i32
    %c0_i32 = arith.constant 0 : i32
    %2 = arith.minsi %1, %c0_i32 : i32
    %c0_i32_0 = arith.constant 0 : i32
    %c0_i32_1 = arith.constant 0 : i32
    return %2, %c0_i32_0 : i32, i32
  }
  func.func @transform_2(%arg0: i32, %arg1: i32) -> (i32, i32, i32) {
    %c0_i32 = arith.constant 0 : i32
    %c0_i32_0 = arith.constant 0 : i32
    %c0_i32_1 = arith.constant 0 : i32
    return %arg0, %c0_i32, %c0_i32_0 : i32, i32, i32
  }
  func.func @transform_3(%arg0: i32, %arg1: i32) -> (i32, i32, i32) {
    %c0_i32 = arith.constant 0 : i32
    %c0_i32_0 = arith.constant 0 : i32
    %c0_i32_1 = arith.constant 0 : i32
    return %arg0, %c0_i32, %c0_i32_0 : i32, i32, i32
  }
  func.func @transform_4(%arg0: i32, %arg1: i32) -> (i32, i32, i32) {
    %c0_i32 = arith.constant 0 : i32
    %c0_i32_0 = arith.constant 0 : i32
    %c0_i32_1 = arith.constant 0 : i32
    return %arg0, %c0_i32, %c0_i32_0 : i32, i32, i32
  }
}

module attributes {stable_mosaic.version = 11 : i64} {
  func.func @_norm_kernel(%arg0: i32, %arg1: memref<8x128xf32, #tpu.memory_space<vmem>>, %arg2: memref<1x128xf32, #tpu.memory_space<vmem>>, %arg3: memref<1x128xf32, #tpu.memory_space<vmem>>, %arg4: memref<8x128xf32, #tpu.memory_space<vmem>>) attributes {dimension_semantics = [#tpu.dimension_semantics<parallel>], iteration_bounds = array<i64: 1>, scalar_prefetch = 0 : i64, scratch_operands = 0 : i64, tpu.core_type = #tpu.core_type<tc>, window_params = [{transform_indices = @transform_0, window_bounds = array<i64: 8, 128>}, {pipeline_mode = #tpu.pipeline_mode<synchronous>, transform_indices = @transform_1, window_bounds = array<i64: 1, 128>}, {pipeline_mode = #tpu.pipeline_mode<synchronous>, transform_indices = @transform_2, window_bounds = array<i64: 1, 128>}, {transform_indices = @transform_3, window_bounds = array<i64: 8, 128>}]} {
    %c0 = arith.constant 0 : index
    %c0_0 = arith.constant 0 : index
    %0 = vector.load %arg1[%c0, %c0_0] : memref<8x128xf32, #tpu.memory_space<vmem>>, vector<8x128xf32>
    %c0_1 = arith.constant 0 : index
    %c0_2 = arith.constant 0 : index
    %1 = vector.load %arg2[%c0_1, %c0_2] : memref<1x128xf32, #tpu.memory_space<vmem>>, vector<1x128xf32>
    %2 = vector.broadcast %1 : vector<1x128xf32> to vector<8x128xf32>
    %3 = arith.subf %0, %2 : vector<8x128xf32>
    %c0_3 = arith.constant 0 : index
    %c0_4 = arith.constant 0 : index
    %4 = vector.load %arg3[%c0_3, %c0_4] : memref<1x128xf32, #tpu.memory_space<vmem>>, vector<1x128xf32>
    %5 = vector.broadcast %4 : vector<1x128xf32> to vector<8x128xf32>
    %6 = arith.mulf %3, %5 : vector<8x128xf32>
    %cst = arith.constant -1.000000e+01 : f32
    %cst_5 = arith.constant 1.000000e+01 : f32
    %7 = vector.broadcast %cst : f32 to vector<8x128xf32>
    %8 = arith.maximumf %7, %6 : vector<8x128xf32>
    %9 = vector.broadcast %cst_5 : f32 to vector<8x128xf32>
    %10 = arith.minimumf %9, %8 : vector<8x128xf32>
    %c0_6 = arith.constant 0 : index
    %c0_7 = arith.constant 0 : index
    %11 = vector.load %arg4[%c0_6, %c0_7] : memref<8x128xf32, #tpu.memory_space<vmem>>, vector<8x128xf32>
    tpu.vector_store %arg4[%c0_6, %c0_7], %10 {strides = array<i32>} : memref<8x128xf32, #tpu.memory_space<vmem>>, vector<8x128xf32>,
    return
  }
  func.func @transform_0(%arg0: i32) -> (i32, i32) {
    %c0_i32 = arith.constant 0 : i32
    %c0_i32_0 = arith.constant 0 : i32
    return %arg0, %c0_i32 : i32, i32
  }
  func.func @transform_1(%arg0: i32) -> (i32, i32) {
    %c0_i32 = arith.constant 0 : i32
    %c0_i32_0 = arith.constant 0 : i32
    %c0_i32_1 = arith.constant 0 : i32
    return %c0_i32, %c0_i32_0 : i32, i32
  }
  func.func @transform_2(%arg0: i32) -> (i32, i32) {
    %c0_i32 = arith.constant 0 : i32
    %c0_i32_0 = arith.constant 0 : i32
    %c0_i32_1 = arith.constant 0 : i32
    return %c0_i32, %c0_i32_0 : i32, i32
  }
  func.func @transform_3(%arg0: i32) -> (i32, i32) {
    %c0_i32 = arith.constant 0 : i32
    %c0_i32_0 = arith.constant 0 : i32
    return %arg0, %c0_i32 : i32, i32
  }
}

</mosaic_0001>

<llo_original>
// kernel: tile.19
$region0: #{tile.19}
  %s0 = inlined_call_operand.vmem [shape: f32[4,32], index: 0, kind: input, shape index: {}]
  %s1 = inlined_call_operand.vmem [shape: f32[1,128], index: 1, kind: output, shape index: {}]
  $region1: #{tile.19} parent=0
    #allocation0 [shape = 'u8[4096]{0}', space=vmem, size = 0x1000, scoped, tag = 'scoped mem for output reshape']
    #allocation1 [shape = 'u8[4096]{0}', space=vmem, size = 0x1000, scoped, tag = 'scoped mem for input reshape']
    %s3 = sshllo.u32 0, 4
    %v4 = vld [vmem:[%s0] sm:%s3]
    %5 = vst [vmem:[#allocation1] sm:%s3] %v4
    %v6 = vld [vmem:[#allocation1] sm:$0x1]
    %vm7 = vcmask 261120
    %8 = vst.msk [vmem:[#allocation0] sm:$0x1] %vm7, %v6
    %s9 = scalar_lea.vmem [#allocation1], 3
    %v10 = vld [vmem:[%s9] sm:$0x1]
    %11 = vrot.lane.b32.xlu0 %v10, 96
    %v12 = vpop.permute.xlu0 %11
    %vm13 = vcmask 1048320
    %14 = vst.msk [vmem:[#allocation0] sm:$0x1] %vm13, %v12
    %s15 = scalar_lea.vmem [#allocation1], 2
    %v16 = vld [vmem:[%s15] sm:$0x1]
    %17 = vrot.lane.b32.xlu0 %v16, 64
    %v18 = vpop.permute.xlu0 %17
    %vm19 = vcmask 785920
    %20 = vst.msk [vmem:[#allocation0] sm:$0x1] %vm19, %v18
    %s21 = scalar_lea.vmem [#allocation1], 1
    %v22 = vld [vmem:[%s21] sm:$0x1]
    %23 = vrot.lane.b32.xlu0 %v22, 32
    %v24 = vpop.permute.xlu0 %23
    %vm25 = vcmask 523520
    %26 = vst.msk [vmem:[#allocation0] sm:$0x1] %vm25, %v24
    %s28 = sshllo.u32 0, 1
    %v30 = vld [vmem:[#allocation0] sm:%s28]
    %s31 = sshllo.u32 0, 1
    %32 = vst [vmem:[%s1] sm:%s31] %v30

// kernel: tile.18
$region0: #{tile.18}
  #allocation0 [shape = 's32[1]{0}', space=sflag, size = 0x4, scoped, tag = 'scoped memory for tile.18']
  %s0 = inlined_call_operand.vmem [shape: f32[32], index: 0, kind: input, shape index: {}]
  %s1 = inlined_call_operand.vmem [shape: f32[4,32], index: 1, kind: output, shape index: {}]
  // Predicated region
  $region2: #{tile.18} parent=0 // pred_check
    _
  $region3: #{tile.18} parent=0 // pred_check_branch
    %3 = sbr.rel (0) target = $region5
  $region4: #{tile.18} parent=0 // pred_region
    _
  $region5: #{tile.18} parent=0 // pred_fallthru
    _
  %v4 = vld [vmem:[%s0] ss:$0 sm:$0xff]
  %5 = vst [vmem:[%s1] sm:$0xf] %v4

</llo_original>
